<compile_context>
chip_gen: v7x
topology: tpu7x:2x2x1
jax: 0.10.0
libtpu: 0.0.40
codegen_flags: <defaults>
</compile_context>

<pallas_src>
import functools

import jax
import jax.numpy as jnp
from jax.experimental import pallas as pl
from jax.experimental.pallas import tpu as pltpu


def _round_up(a: int, m: int) -> int:
    return (a + m - 1) // m * m


def _vmem_capacity_bytes() -> int:
    try:
        return int(pltpu.get_tpu_info().vmem_capacity_bytes)
    except Exception:  # conservative fallback = v7x-sized VMEM
        return 64 * 1024 * 1024


def _gcn_kernel_single(adj_ref, sup_ref, b_ref, o_ref):
    # Collapsed-K path: one (tm, N) @ (N, fout_p) matmul per grid step,
    # no accumulator scratch, direct lane-dense store.
    prod = jnp.dot(adj_ref[0], sup_ref[0], preferred_element_type=jnp.float32)
    o_ref[0] = (prod + b_ref[...]).astype(o_ref.dtype)


def _gcn_kernel_multi(adj_ref, sup_ref, b_ref, o_ref, acc_ref, *, num_k, tk, rem):
    k = pl.program_id(2)

    @pl.when(k == 0)
    def _():
        acc_ref[...] = jnp.zeros_like(acc_ref)

    a = adj_ref[0]
    if rem:
        # Ragged K edge: columns >= N of the last K tile hold stale VMEM that
        # can decode to NaN/Inf -> zero them before the matmul.  Support rows
        # beyond N are zero-padded in the wrapper, so the edge contributes
        # exactly 0.  The VPU select co-issues with the MXU (~free).
        limit = jnp.where(k == num_k - 1, rem, tk)
        col = jax.lax.broadcasted_iota(jnp.int32, a.shape, 1)
        a = jnp.where(col < limit, a, jnp.zeros_like(a))

    acc_ref[...] += jnp.dot(a, sup_ref[0], preferred_element_type=jnp.float32)

    @pl.when(k == num_k - 1)
    def _():
        o_ref[0] = (acc_ref[...] + b_ref[...]).astype(o_ref.dtype)


def graph_convolution(adj, x, weight, bias=None, *, tile_m=512, tile_k=1024,
                      compute_dtype=None, out_dtype=None, adj_buffers=2,
                      collapse_k=None):
    """adj:(B,N,N), x:(B,N,Fin), weight:(Fin,Fout), bias:(Fout,)|None -> (B,N,Fout)."""
    B, N, Fin = x.shape
    Fout = weight.shape[1]
    assert adj.shape == (B, N, N), "adj must be (B, N, N)"
    if out_dtype is None:
        out_dtype = x.dtype

    # adj stream dtype: leave adj untouched by default (no extra HBM copy).
    # For best perf pass adj already in bfloat16 (producer-side cast).
    stream_dtype = (jnp.dtype(adj.dtype) if compute_dtype is None
                    else jnp.dtype(compute_dtype))
    if adj.dtype != stream_dtype:
        # NOTE: materializes an O(N^2) cast copy — prefer casting upstream.
        adj = adj.astype(stream_dtype)

    # Lane-dense output: pad Fout to a multiple of 128 (NOT 256 — zero columns
    # are dead MXU work and the kernel is memory-bound anyway).
    fout_p = _round_up(Fout, 128)
    w_p = weight if fout_p == Fout else jnp.pad(weight, ((0, 0), (0, fout_p - Fout)))

    # support = x @ W: plain XLA matmul, O(B*N*Fin*Fout) — tiny next to the
    # O(B*N^2*Fout) adjacency bmm.  Streamed to the kernel from HBM.
    support = jnp.einsum("bnf,fo->bno", x, w_p).astype(stream_dtype)

    if bias is None:
        b_p = jnp.zeros((1, fout_p), jnp.float32)
    else:
        b_p = jnp.pad(bias.astype(jnp.float32), (0, fout_p - Fout)).reshape(1, fout_p)

    # ---- Tile selection with a generation-aware VMEM budget ----------------
    cb = jnp.dtype(stream_dtype).itemsize
    ob = jnp.dtype(out_dtype).itemsize
    vmem_cap = _vmem_capacity_bytes()
    if vmem_cap >= 100 * 1024 * 1024:          # 128-MiB parts (v5e / v6e)
        limit_cap = vmem_cap - 24 * 1024 * 1024
    else:                                      # 64-MiB v7x: leave Mosaic headroom
        limit_cap = vmem_cap - 8 * 1024 * 1024
    tile_budget = int(limit_cap * 0.6)

    def est_vmem(tm_, tk_, multi_k):
        est = adj_buffers * tm_ * tk_ * cb     # adj stream (dominant traffic)
        est += 2 * tk_ * fout_p * cb           # support stream
        est += 2 * fout_p * 4                  # bias
        est += 2 * tm_ * fout_p * ob           # output tile
        if multi_k:
            est += tm_ * fout_p * 4            # f32 accumulator
        return est

    tm = min(tile_m, _round_up(N, 8))
    assert tm % 8 == 0 or tm == N, "tile_m must be a multiple of 8"

    if collapse_k is None:
        collapse_k = est_vmem(tm, N, False) <= tile_budget
    if collapse_k:
        tk, num_k = N, 1
    else:
        tk = tile_k
        assert tk % 128 == 0, "tile_k must be a multiple of 128"
        while est_vmem(tm, tk, True) > tile_budget and tk > 128:
            tk //= 2
        num_k = -(-N // tk)
    num_m = -(-N // tm)

    # Zero-pad support rows up to num_k*tk so every streamed support block is
    # fully in-bounds (pairs with the in-kernel adj edge mask).  O(N*Fout).
    n_sup = num_k * tk
    if n_sup != N:
        support = jnp.pad(support, ((0, 0), (0, n_sup - N), (0, 0)))

    vmem_limit = min(limit_cap,
                     max(int(est_vmem(tm, tk, num_k > 1) * 1.5) + (4 << 20),
                         32 * 1024 * 1024))

    adj_kwargs = {}
    if adj_buffers != 2:
        adj_kwargs["pipeline_mode"] = pl.Buffered(adj_buffers)

    if num_k == 1:
        kernel = _gcn_kernel_single
        scratch = []
    else:
        kernel = functools.partial(_gcn_kernel_multi, num_k=num_k, tk=tk, rem=N % tk)
        scratch = [pltpu.VMEM((tm, fout_p), jnp.float32)]

    out_p = pl.pallas_call(
        kernel,
        out_shape=jax.ShapeDtypeStruct((B, N, fout_p), out_dtype),
        grid_spec=pltpu.PrefetchScalarGridSpec(
            num_scalar_prefetch=0,
            grid=(B, num_m, num_k),
            in_specs=[
                pl.BlockSpec((1, tm, tk), lambda b, m, k: (b, m, k), **adj_kwargs),
                pl.BlockSpec((1, tk, fout_p), lambda b, m, k: (b, k, 0)),
                pl.BlockSpec((1, fout_p), lambda b, m, k: (0, 0)),
            ],
            out_specs=pl.BlockSpec((1, tm, fout_p), lambda b, m, k: (b, m, 0)),
            scratch_shapes=scratch,
        ),
        compiler_params=pltpu.CompilerParams(
            # support comes from HBM (no per-core cache), so row tiles can be
            # sharded across v7x's 2 TensorCores; K (reduction) stays arbitrary.
            dimension_semantics=("parallel", "parallel", "arbitrary"),
            vmem_limit_bytes=int(vmem_limit),
        ),
    )(adj, support, b_p)

    return out_p if fout_p == Fout else out_p[..., :Fout]


if __name__ == "__main__":
    def make_inputs(key, B, N, Fin, Fout):
        k_adj, k_x, k_w, k_b = jax.random.split(key, 4)
        adj = jax.random.uniform(k_adj, (B, N, N), dtype=jnp.float32)
        adj = adj / jnp.sum(adj, axis=-1, keepdims=True)   # row-normalized
        x = jax.random.normal(k_x, (B, N, Fin), dtype=jnp.float32)
        w = jax.random.normal(k_w, (Fin, Fout), dtype=jnp.float32) * 0.1
        b = jax.random.normal(k_b, (Fout,), dtype=jnp.float32) * 0.1
        return adj, x, w, b

    def reference(adj, x, w, b):
        return jnp.einsum("bij,bjf->bif", adj, x @ w) + b

    # Case 1: tiny graph (collapsed-K single-tile path), shapes per the module.
    B, N, Fin, Fout = 2, 8, 16, 32
    adj, x, w, b = make_inputs(jax.random.PRNGKey(0), B, N, Fin, Fout)
    out = jax.block_until_ready(graph_convolution(adj, x, w, b))
    ref = reference(adj, x, w, b)
    assert out.shape == (B, N, Fout)
    assert jnp.allclose(out, ref, atol=1e-4, rtol=1e-4), "f32 collapsed-K mismatch"

    # Case 2: ragged graph forcing the tiled/accumulating path with both an
    # M edge and a K edge (exercises the in-kernel edge mask, no adj padding).
    B2, N2 = 2, 333
    adj2, x2, w2, b2 = make_inputs(jax.random.PRNGKey(1), B2, N2, Fin, Fout)
    out2 = jax.block_until_ready(
        graph_convolution(adj2, x2, w2, b2, tile_m=64, tile_k=128,
                          collapse_k=False))
    ref2 = reference(adj2, x2, w2, b2)
    assert out2.shape == (B2, N2, Fout)
    assert jnp.allclose(out2, ref2, atol=2e-3, rtol=2e-3), "tiled-path mismatch"

    # Case 3: recommended fast path — adj/x handed over in bf16 producer-side
    # (no wrapper-side cast copy), f32 accumulation inside the kernel.
    out_bf16 = jax.block_until_ready(
        graph_convolution(adj.astype(jnp.bfloat16), x.astype(jnp.bfloat16), w, b))
    assert jnp.allclose(out_bf16.astype(jnp.float32), ref,
                        atol=5e-2, rtol=5e-2), "bf16 streaming mismatch"

    print("KERNEL_OK")
</pallas_src>

<mosaic_0001>
module attributes {stable_mosaic.version = 11 : i64} {
  func.func @_gcn_kernel_single(%arg0: i32, %arg1: i32, %arg2: i32, %arg3: memref<1x8x8xf32, #tpu.memory_space<vmem>>, %arg4: memref<1x8x128xf32, #tpu.memory_space<vmem>>, %arg5: memref<1x128xf32, #tpu.memory_space<vmem>>, %arg6: memref<1x8x128xf32, #tpu.memory_space<vmem>>) attributes {dimension_semantics = [#tpu.dimension_semantics<parallel>, #tpu.dimension_semantics<parallel>, #tpu.dimension_semantics<arbitrary>], iteration_bounds = array<i64: 2, 1, 1>, scalar_prefetch = 0 : i64, scratch_operands = 0 : i64, tpu.core_type = #tpu.core_type<tc>, window_params = [{transform_indices = @transform_0, window_bounds = array<i64: 1, 8, 8>}, {transform_indices = @transform_1, window_bounds = array<i64: 1, 8, 128>}, {pipeline_mode = #tpu.pipeline_mode<synchronous>, transform_indices = @transform_2, window_bounds = array<i64: 1, 128>}, {transform_indices = @transform_3, window_bounds = array<i64: 1, 8, 128>}]} {
    %c0 = arith.constant 0 : index
    %c0_0 = arith.constant 0 : index
    %c0_1 = arith.constant 0 : index
    %0 = vector.load %arg3[%c0, %c0_0, %c0_1] : memref<1x8x8xf32, #tpu.memory_space<vmem>>, vector<1x8x8xf32>
    %1 = vector.shape_cast %0 : vector<1x8x8xf32> to vector<8x8xf32>
    %c0_2 = arith.constant 0 : index
    %c0_3 = arith.constant 0 : index
    %c0_4 = arith.constant 0 : index
    %2 = vector.load %arg4[%c0_2, %c0_3, %c0_4] : memref<1x8x128xf32, #tpu.memory_space<vmem>>, vector<1x8x128xf32>
    %3 = vector.shape_cast %2 : vector<1x8x128xf32> to vector<8x128xf32>
    %cst = arith.constant dense<0.000000e+00> : vector<8x128xf32>
    %4 = tpu.matmul %1, %3, %cst {dimension_numbers = #tpu.dot_dimension_numbers<[1], [0], [0], [1], [0, 0, 1, 1], [], []>} : vector<8x8xf32>, vector<8x128xf32>, vector<8x128xf32> -> vector<8x128xf32>
    %c0_5 = arith.constant 0 : index
    %c0_6 = arith.constant 0 : index
    %5 = vector.load %arg5[%c0_5, %c0_6] : memref<1x128xf32, #tpu.memory_space<vmem>>, vector<1x128xf32>
    %6 = vector.broadcast %5 : vector<1x128xf32> to vector<8x128xf32>
    %7 = arith.addf %4, %6 : vector<8x128xf32>
    %c0_7 = arith.constant 0 : index
    %c0_8 = arith.constant 0 : index
    %c0_9 = arith.constant 0 : index
    %8 = vector.load %arg6[%c0_7, %c0_8, %c0_9] : memref<1x8x128xf32, #tpu.memory_space<vmem>>, vector<1x8x128xf32>
    %9 = vector.shape_cast %8 : vector<1x8x128xf32> to vector<8x128xf32>
    %10 = vector.shape_cast %7 : vector<8x128xf32> to vector<1x8x128xf32>
    tpu.vector_store %arg6[%c0_7, %c0_8, %c0_9], %10 {strides = array<i32>} : memref<1x8x128xf32, #tpu.memory_space<vmem>>, vector<1x8x128xf32>,
    return
  }
  func.func @transform_0(%arg0: i32, %arg1: i32, %arg2: i32) -> (i32, i32, i32) {
    %c0_i32 = arith.constant 0 : i32
    return %arg0, %arg1, %arg2 : i32, i32, i32
  }
  func.func @transform_1(%arg0: i32, %arg1: i32, %arg2: i32) -> (i32, i32, i32) {
    %c0_i32 = arith.constant 0 : i32
    %c0_i32_0 = arith.constant 0 : i32
    return %arg0, %arg2, %c0_i32 : i32, i32, i32
  }
  func.func @transform_2(%arg0: i32, %arg1: i32, %arg2: i32) -> (i32, i32) {
    %c0_i32 = arith.constant 0 : i32
    %c0_i32_0 = arith.constant 0 : i32
    %c0_i32_1 = arith.constant 0 : i32
    return %c0_i32, %c0_i32_0 : i32, i32
  }
  func.func @transform_3(%arg0: i32, %arg1: i32, %arg2: i32) -> (i32, i32, i32) {
    %c0_i32 = arith.constant 0 : i32
    %c0_i32_0 = arith.constant 0 : i32
    return %arg0, %arg1, %c0_i32 : i32, i32, i32
  }
}

</mosaic_0001>

<llo_original>
// kernel: tpu_custom_call.1
$region0: #{tpu_custom_call.1}
  #allocation0 [shape = 'u32[]', space=smem, size = 0x4, offset = 0x4, fixed_abs, tag = 'smem constant byte address 0x4 - core index']
  #allocation1 [shape = 'u32[144,128]{1,0:T(1,128)}', space=vmem, size = 0x12000, scoped, tag = 'internal scratch']
  %s0 = inlined_call_operand.hbm [shape: f32[2,8,8], index: 0, kind: input, shape index: {}]
  %s1 = inlined_call_operand.hbm [shape: f32[2,8,128], index: 1, kind: input, shape index: {}]
  %s2 = inlined_call_operand.vmem [shape: f32[1,128], index: 2, kind: input, shape index: {}]
  %s3 = inlined_call_operand.hbm [shape: f32[2,8,128], index: 3, kind: output, shape index: {}]
  %s4 = sld [smem:[#allocation0]]
  $region53: #{tpu_custom_call.1} parent=0
    _
  %s6 = ssub.s32 1, %s4
  %s7 = scalar_select 0, %s6, %s4
  $region1: #{tpu_custom_call.1} parent=0
    #allocation2 [shape = 'u8[8192]{0}', space=vmem, size = 0x2000, scoped, tag = 'input window, operand 0']
    #allocation3 [shape = 's32[2]{0}', space=sflag, size = 0x8, scoped, tag = 'scoped memory for tpu_custom_call.1']
    #allocation4 [shape = 's32[2]{0}', space=sflag, size = 0x8, scoped, tag = 'scoped memory for tpu_custom_call.1']
    #allocation5 [shape = 'u8[8192]{0}', space=vmem, size = 0x2000, scoped, tag = 'input window, operand 1']
    #allocation6 [shape = 's32[2]{0}', space=sflag, size = 0x8, scoped, tag = 'scoped memory for tpu_custom_call.1']
    #allocation7 [shape = 'u8[8192]{0}', space=vmem, size = 0x2000, scoped, tag = 'output window, operand 0']
    %8 = vsyncpa [#allocation3], 0
    %s9 = scalar_lea.sflag [#allocation3], 1
    %10 = vsyncpa %s9, 0
    %11 = vsyncpa [#allocation6], 0
    %s12 = scalar_lea.sflag [#allocation6], 1
    %13 = vsyncpa %s12, 0
    %14 = vsyncpa [#allocation4], 0
    %s15 = scalar_lea.sflag [#allocation4], 1
    %16 = vsyncpa %s15, 0
    loop: start=0, step=1, limit=4
    $region2: #{tpu_custom_call.1} parent=1 // loop_pre_header
      _
    $region3: #{tpu_custom_call.1} parent=1 // loop_header
      %s18 = sphi 0, %s22
      %p19 = scmp.ge.s32.totalorder %s18, 4
      %s25 = sphi 0, %s44
      %s26 = sphi 0, %s40
      %s27 = sphi 0, %s36
      %s28 = sphi 0, %s25
      %s29 = sphi 0, %s26
      %s30 = sphi 0, %s27
      %s31 = sphi 0, %s28
      %s32 = sphi 0, %s29
      %s33 = sphi 0, %s30
      %s51 = sphi 0, %s53
      %s54 = sphi 0, %s51
      %s55 = sphi 0, %s54
      %s71 = sphi 0, %s55
      %s79 = sphi 0, %s81
      %s82 = sphi 0, %s79
      %s83 = sphi 0, %s82
      %s99 = sphi 0, %s83
      %s103 = sphi 0, %s103
      %s105 = sphi 0, %s103
      %s106 = sphi 0, %s105
      %s120 = sphi 0, %s106
      %s128 = sphi 0, %s130
      %s131 = sphi 0, %s128
      %s132 = sphi 0, %s131
      %s148 = sphi 0, %s132
    $region4: #{tpu_custom_call.1} parent=1 // loop_header_branch
      %21 = sbr.rel (%p19) target = $region8
    $region5: #{tpu_custom_call.1} parent=1 // loop_body
      %s23 = ssub.s32 %s18, 1
      %s24 = ssub.s32 %s18, 2
      %s34 = sadd.s32 1, %s27
      %p35 = scmp.ge.s32.totalorder %s34, 1
      %s36 = scalar_select %p35, 0, %s34
      %s37 = sadd.s32 1, %s26
      %s38 = scalar_select %p35, %s37, %s26
      %p39 = scmp.ge.s32.totalorder %s38, 1
      %s40 = scalar_select %p39, 0, %s38
      %s41 = sadd.s32 1, %s25
      %s42 = scalar_select %p39, %s41, %s25
      %p43 = scmp.ge.s32.totalorder %s42, 2
      %s44 = scalar_select %p43, 0, %s42
      %s45 = ssub.s32 %s25, %s44
      %s46 = ssub.s32 %s26, %s40
      %s47 = sor.u32 %s45, %s46
      %s48 = ssub.s32 %s27, %s36
      %s49 = sor.u32 %s47, %s48
      %p50 = scmp.eq.s32.totalorder %s49, 0
      %s52 = sadd.s32 %s51, 1
      %s53 = scalar_select %p50, %s51, %s52
      %p56 = pneg %p50
      %p57 = scmp.eq.s32.totalorder %s18, 1
      %p58 = por %p56, %p57
      %p59 = scmp.ne.s32.totalorder %s51, %s54
      %p60 = scmp.eq.s32.totalorder %s18, 0
      %p61 = por %p59, %p60
      %p62 = scmp.ne.s32.totalorder %s51, %s54
      %p63 = scmp.eq.s32.totalorder %s23, 1
      %p64 = por %p62, %p63
      %p65 = scmp.ne.s32.totalorder %s54, %s55
      %p66 = scmp.eq.s32.totalorder %s23, 0
      %p67 = por %p65, %p66
      %p68 = scmp.ne.s32.totalorder %s54, %s55
      %p69 = scmp.eq.s32.totalorder %s24, 1
      %p70 = por %p68, %p69
      %p72 = scmp.ne.s32.totalorder %s55, %s71
      %p73 = scmp.eq.s32.totalorder %s24, 0
      %p74 = por %p72, %p73
      %s75 = ssub.s32 %s25, %s44
      %s76 = ssub.s32 %s27, %s36
      %s77 = sor.u32 %s75, %s76
      %p78 = scmp.eq.s32.totalorder %s77, 0
      %s80 = sadd.s32 %s79, 1
      %s81 = scalar_select %p78, %s79, %s80
      %p84 = pneg %p78
      %p85 = scmp.eq.s32.totalorder %s18, 1
      %p86 = por %p84, %p85
      %p87 = scmp.ne.s32.totalorder %s79, %s82
      %p88 = scmp.eq.s32.totalorder %s18, 0
      %p89 = por %p87, %p88
      %p90 = scmp.ne.s32.totalorder %s79, %s82
      %p91 = scmp.eq.s32.totalorder %s23, 1
      %p92 = por %p90, %p91
      %p93 = scmp.ne.s32.totalorder %s82, %s83
      %p94 = scmp.eq.s32.totalorder %s23, 0
      %p95 = por %p93, %p94
      %p96 = scmp.ne.s32.totalorder %s82, %s83
      %p97 = scmp.eq.s32.totalorder %s24, 1
      %p98 = por %p96, %p97
      %p100 = scmp.ne.s32.totalorder %s83, %s99
      %p101 = scmp.eq.s32.totalorder %s24, 0
      %p102 = por %p100, %p101
      %s104 = sadd.s32 %s103, 1
      %p107 = scmp.eq.s32.totalorder %s18, 1
      %p108 = scmp.ne.s32.totalorder %s103, %s105
      %p109 = scmp.eq.s32.totalorder %s18, 0
      %p110 = por %p108, %p109
      %p111 = scmp.ne.s32.totalorder %s103, %s105
      %p112 = scmp.eq.s32.totalorder %s23, 1
      %p113 = por %p111, %p112
      %p114 = scmp.ne.s32.totalorder %s105, %s106
      %p115 = scmp.eq.s32.totalorder %s23, 0
      %p116 = por %p114, %p115
      %p117 = scmp.ne.s32.totalorder %s105, %s106
      %p118 = scmp.eq.s32.totalorder %s24, 1
      %p119 = por %p117, %p118
      %p121 = scmp.ne.s32.totalorder %s106, %s120
      %p122 = scmp.eq.s32.totalorder %s24, 0
      %p123 = por %p121, %p122
      %s124 = ssub.s32 %s25, %s44
      %s125 = ssub.s32 %s26, %s40
      %s126 = sor.u32 %s124, %s125
      %p127 = scmp.eq.s32.totalorder %s126, 0
      %s129 = sadd.s32 %s128, 1
      %s130 = scalar_select %p127, %s128, %s129
      %p133 = pneg %p127
      %p134 = scmp.eq.s32.totalorder %s18, 1
      %p135 = por %p133, %p134
      %p136 = scmp.ne.s32.totalorder %s128, %s131
      %p137 = scmp.eq.s32.totalorder %s18, 0
      %p138 = por %p136, %p137
      %p139 = scmp.ne.s32.totalorder %s128, %s131
      %p140 = scmp.eq.s32.totalorder %s23, 1
      %p141 = por %p139, %p140
      %p142 = scmp.ne.s32.totalorder %s131, %s132
      %p143 = scmp.eq.s32.totalorder %s23, 0
      %p144 = por %p142, %p143
      %p145 = scmp.ne.s32.totalorder %s131, %s132
      %p146 = scmp.eq.s32.totalorder %s24, 1
      %p147 = por %p145, %p146
      %p149 = scmp.ne.s32.totalorder %s132, %s148
      %p150 = scmp.eq.s32.totalorder %s24, 0
      %p151 = por %p149, %p150
      %p152 = scmp.le.s32.totalorder 1, %s18
      %p153 = scmp.lt.s32.totalorder %s18, 3
      %p154 = pnand %p152, %p153
      %p155 = pneg %p154
      // Predicated region
      $region9: #{tpu_custom_call.1} parent=5 // pred_check
        _
      $region10: #{tpu_custom_call.1} parent=5 // pred_check_branch
        %157 = sbr.rel (%p154) target = $region12
      $region11: #{tpu_custom_call.1} parent=5 // pred_region
        %s158 = ssub.s32 %s18, 1
        // Predicated region
        $region13: #{tpu_custom_call.1} parent=11 // pred_check
          %p159 = pneg %p116
        $region14: #{tpu_custom_call.1} parent=11 // pred_check_branch
          %161 = sbr.rel (%p159) target = $region16
        $region15: #{tpu_custom_call.1} parent=11 // pred_region
          _
        $region16: #{tpu_custom_call.1} parent=11 // pred_fallthru
          _
      $region12: #{tpu_custom_call.1} parent=5 // pred_fallthru
        _
      %p162 = scmp.lt.s32.totalorder %s18, 2
      // Predicated region
      $region17: #{tpu_custom_call.1} parent=5 // pred_check
        %p163 = pneg %p162
      $region18: #{tpu_custom_call.1} parent=5 // pred_check_branch
        %165 = sbr.rel (%p163) target = $region20
      $region19: #{tpu_custom_call.1} parent=5 // pred_region
        // Predicated region
        $region21: #{tpu_custom_call.1} parent=19 // pred_check
          %p166 = pneg %p61
        $region22: #{tpu_custom_call.1} parent=19 // pred_check_branch
          %168 = sbr.rel (%p166) target = $region24
        $region23: #{tpu_custom_call.1} parent=19 // pred_region
          %s169 = sand.u32 %s51, 1
          %s170 = scalar_lea.sflag [#allocation3], %s169
          %s171 = sand.u32 %s51, 1
          %s172 = smul.addr %s171, 8
          %s173 = scalar_lea.vmem [#allocation2], %s172
          %s175 = ssub.s32 128, 128
          %176 = vsyncadd %s170, %s175
          %s177 = sadd.s32 %s27, %s26
          %s178 = sadd.s32 %s177, %s25
          %s179 = smul.addr %s178, 128
          %s180 = scalar_lea.hbm %s0, %s179
          %s182 = sshll.u32 %s173, 4
          %s183 = int_to_ptr.vmem [resolvable:$true] %s182
          %185 = dma.hbm_to_vmem [thread:$0]  %s180, 128, %s183, %s170
        $region24: #{tpu_custom_call.1} parent=19 // pred_fallthru
          _
        // Predicated region
        $region25: #{tpu_custom_call.1} parent=19 // pred_check
          %p186 = pneg %p89
        $region26: #{tpu_custom_call.1} parent=19 // pred_check_branch
          %188 = sbr.rel (%p186) target = $region28
        $region27: #{tpu_custom_call.1} parent=19 // pred_region
          %s189 = sand.u32 %s79, 1
          %s190 = scalar_lea.sflag [#allocation6], %s189
          %s191 = sand.u32 %s79, 1
          %s192 = smul.addr %s191, 8
          %s193 = scalar_lea.vmem [#allocation5], %s192
          %s195 = ssub.s32 128, 128
          %196 = vsyncadd %s190, %s195
          %s197 = sadd.s32 %s27, %s25
          %s198 = smul.addr %s197, 128
          %s199 = scalar_lea.hbm %s1, %s198
          %s201 = sshll.u32 %s193, 4
          %s202 = int_to_ptr.vmem [resolvable:$true] %s201
          %204 = dma.hbm_to_vmem [thread:$0]  %s199, 128, %s202, %s190
        $region28: #{tpu_custom_call.1} parent=19 // pred_fallthru
          _
      $region20: #{tpu_custom_call.1} parent=5 // pred_fallthru
        _
      %p205 = scmp.le.s32.totalorder 1, %s18
      %p206 = scmp.lt.s32.totalorder %s18, 3
      %p207 = pnand %p205, %p206
      %p208 = pneg %p207
      // Predicated region
      $region29: #{tpu_custom_call.1} parent=5 // pred_check
        _
      $region30: #{tpu_custom_call.1} parent=5 // pred_check_branch
        %210 = sbr.rel (%p207) target = $region32
      $region31: #{tpu_custom_call.1} parent=5 // pred_region
        %s211 = ssub.s32 %s18, 1
        %s212 = sand.u32 %s54, 1
        %s213 = scalar_lea.sflag [#allocation3], %s212
        %s214 = sand.u32 %s54, 1
        %s215 = smul.addr %s214, 8
        %s216 = scalar_lea.vmem [#allocation2], %s215
        // Predicated region
        $region33: #{tpu_custom_call.1} parent=31 // pred_check
          %p217 = pneg %p67
        $region34: #{tpu_custom_call.1} parent=31 // pred_check_branch
          %219 = sbr.rel (%p217) target = $region36
        $region35: #{tpu_custom_call.1} parent=31 // pred_region
          %220 = dma.done %s213, 128
        $region36: #{tpu_custom_call.1} parent=31 // pred_fallthru
          _
        %s221 = sand.u32 %s82, 1
        %s222 = scalar_lea.sflag [#allocation6], %s221
        %s223 = sand.u32 %s82, 1
        %s224 = smul.addr %s223, 8
        %s225 = scalar_lea.vmem [#allocation5], %s224
        // Predicated region
        $region37: #{tpu_custom_call.1} parent=31 // pred_check
          %p226 = pneg %p95
        $region38: #{tpu_custom_call.1} parent=31 // pred_check_branch
          %228 = sbr.rel (%p226) target = $region40
        $region39: #{tpu_custom_call.1} parent=31 // pred_region
          %229 = dma.done %s222, 128
        $region40: #{tpu_custom_call.1} parent=31 // pred_fallthru
          _
        %s230 = sand.u32 %s54, 1
        %s231 = scalar_lea.sflag [#allocation3], %s230
        %s232 = sand.u32 %s54, 1
        %s233 = smul.addr %s232, 8
        %s234 = scalar_lea.vmem [#allocation2], %s233
        %p235 = pneg %p67
        %p236 = pneg %p64
        %s237 = sand.u32 %s82, 1
        %s238 = scalar_lea.sflag [#allocation6], %s237
        %s239 = sand.u32 %s82, 1
        %s240 = smul.addr %s239, 8
        %s241 = scalar_lea.vmem [#allocation5], %s240
        %p242 = pneg %p95
        %p243 = pneg %p92
        %p244 = pneg %p116
        %p245 = pneg %p113
        %p246 = pneg %p144
        %p247 = pneg %p141
        %s248 = sand.u32 %s131, 1
        %s249 = scalar_lea.sflag [#allocation4], %s248
        %s250 = sand.u32 %s131, 1
        %s251 = smul.addr %s250, 8
        %s252 = scalar_lea.vmem [#allocation7], %s251
        %v253 = vld [vmem:[%s216] sm:$0xff]
        %v254 = vld [vmem:[%s225] sm:$0xff]
        %v255 = vld [vmem:[%s2] sm:$0x1]
        %v257 = vlaneseq
        %v258 = vshrl.u32 %v257, 7
        %v259 = vsub.s32 0, %v258
        %v260 = vrot.slane %v255, %v259
        %vm262 = vcmask 64512
        %v264 = vsel %vm262, %v253, 0
        %266 = vmatprep.subr.mxu0 0.0
        %267 = vmatpush1.msra.mxu0 %v254
        %268 = vmatprep.subr.mxu0 0.0
        %269 = vmatpush1.msra.mxu0 0.0
        %270 = vmatprep.subr.mxu0 0.0
        %271 = vmatpush1.msra.mxu0 0.0
        %272 = vmatprep.subr.mxu0 0.0
        %273 = vmatpush1.msra.mxu0 0.0
        %274 = vmatprep.subr.mxu0 0.0
        %275 = vmatpush1.msra.mxu0 0.0
        %276 = vmatprep.subr.mxu0 0.0
        %277 = vmatpush1.msra.mxu0 0.0
        %278 = vmatprep.subr.mxu0 0.0
        %279 = vmatpush1.msra.mxu0 0.0
        %280 = vmatprep.subr.mxu0 0.0
        %281 = vmatpush1.msra.mxu0 0.0
        %282 = vmatprep.subr.mxu0 0.0
        %283 = vmatpush1.msra.mxu0 0.0
        %284 = vmatprep.subr.mxu0 0.0
        %285 = vmatpush1.msra.mxu0 0.0
        %286 = vmatprep.subr.mxu0 0.0
        %287 = vmatpush1.msra.mxu0 0.0
        %288 = vmatprep.subr.mxu0 0.0
        %289 = vmatpush1.msra.mxu0 0.0
        %290 = vmatprep.subr.mxu0 0.0
        %291 = vmatpush1.msra.mxu0 0.0
        %292 = vmatprep.subr.mxu0 0.0
        %293 = vmatpush1.msra.mxu0 0.0
        %294 = vmatprep.subr.mxu0 0.0
        %295 = vmatpush1.msra.mxu0 0.0
        %296 = vmatprep.subr.mxu0 0.0
        %297 = vmatpush1.msra.mxu0 0.0
        %298 = vmatprep.subr.mxu0 0.0
        %299 = vmatpush1.msra.mxu0 0.0
        %300 = vmatprep.subr.mxu0 0.0
        %301 = vmatpush1.msra.mxu0 0.0
        %302 = vmatprep.subr.mxu0 0.0
        %303 = vmatpush1.msra.mxu0 0.0
        %304 = vmatprep.subr.mxu0 0.0
        %305 = vmatpush1.msra.mxu0 0.0
        %306 = vmatprep.subr.mxu0 0.0
        %307 = vmatpush1.msra.mxu0 0.0
        %308 = vmatprep.subr.mxu0 0.0
        %309 = vmatpush1.msra.mxu0 0.0
        %310 = vmatprep.subr.mxu0 0.0
        %311 = vmatpush1.msra.mxu0 0.0
        %312 = vmatprep.subr.mxu0 0.0
        %313 = vmatpush1.msra.mxu0 0.0
        %314 = vmatprep.subr.mxu0 0.0
        %315 = vmatpush1.msra.mxu0 0.0
        %316 = vmatprep.subr.mxu0 0.0
        %317 = vmatpush1.msra.mxu0 0.0
        %318 = vmatprep.subr.mxu0 0.0
        %319 = vmatpush1.msra.mxu0 0.0
        %320 = vmatprep.subr.mxu0 0.0
        %321 = vmatpush1.msra.mxu0 0.0
        %322 = vmatprep.subr.mxu0 0.0
        %323 = vmatpush1.msra.mxu0 0.0
        %324 = vmatprep.subr.mxu0 0.0
        %325 = vmatpush1.msra.mxu0 0.0
        %326 = vmatprep.subr.mxu0 0.0
        %327 = vmatpush1.msra.mxu0 0.0
        %328 = vmatprep.subr.mxu0 0.0
        %329 = vmatpush1.msra.mxu0 0.0
        %330 = vmatprep.mubr.f32.mxu0 0.0
        %331 = vmatmul.mubr.f32.gmra.mrb[0].mxu0 %v264
        %v332 = vpop.f32.mrb[0].mxu0
        %v333 = vadd.f32 %v260, %v332
        %v334 = vpop.f32.mrb[0].mxu0
        %335 = vdwg.mxu0
        %336 = vst [vmem:[%s252] sm:$0xff] %v333
        %s337 = sand.u32 %s131, 1
        %s338 = scalar_lea.sflag [#allocation4], %s337
        %s339 = sand.u32 %s131, 1
        %s340 = smul.addr %s339, 8
        %s341 = scalar_lea.vmem [#allocation7], %s340
        // Predicated region
        $region41: #{tpu_custom_call.1} parent=31 // pred_check
          %p342 = pneg %p141
        $region42: #{tpu_custom_call.1} parent=31 // pred_check_branch
          %344 = sbr.rel (%p342) target = $region44
        $region43: #{tpu_custom_call.1} parent=31 // pred_region
          %s346 = ssub.s32 128, 128
          %347 = vsyncadd %s338, %s346
          %s348 = sadd.s32 %s29, %s28
          %s349 = smul.addr %s348, 128
          %s350 = scalar_lea.hbm %s3, %s349
          %s352 = sshll.u32 %s341, 4
          %s353 = int_to_ptr.vmem [resolvable:$true] %s352
          %355 = dma.vmem_to_hbm [thread:$0]  %s353, 128, %s350, %s338
        $region44: #{tpu_custom_call.1} parent=31 // pred_fallthru
          _
      $region32: #{tpu_custom_call.1} parent=5 // pred_fallthru
        _
      %p356 = scmp.le.s32.totalorder 2, %s18
      // Predicated region
      $region45: #{tpu_custom_call.1} parent=5 // pred_check
        %p357 = pneg %p356
      $region46: #{tpu_custom_call.1} parent=5 // pred_check_branch
        %359 = sbr.rel (%p357) target = $region48
      $region47: #{tpu_custom_call.1} parent=5 // pred_region
        %s360 = ssub.s32 %s18, 2
        // Predicated region
        $region49: #{tpu_custom_call.1} parent=47 // pred_check
          %p361 = pneg %p147
        $region50: #{tpu_custom_call.1} parent=47 // pred_check_branch
          %363 = sbr.rel (%p361) target = $region52
        $region51: #{tpu_custom_call.1} parent=47 // pred_region
          %s364 = sand.u32 %s132, 1
          %s365 = scalar_lea.sflag [#allocation4], %s364
          %s366 = sand.u32 %s132, 1
          %s367 = smul.addr %s366, 8
          %s368 = scalar_lea.vmem [#allocation7], %s367
          %369 = dma.done %s365, 128
        $region52: #{tpu_custom_call.1} parent=47 // pred_fallthru
          _
      $region48: #{tpu_custom_call.1} parent=5 // pred_fallthru
        _
    $region6: #{tpu_custom_call.1} parent=1 // loop_footer
      %s22 = sadd.s32 1, %s18
    $region7: #{tpu_custom_call.1} parent=1 // loop_footer_branch
      %17 = sbr.rel target = $region3
    $region8: #{tpu_custom_call.1} parent=1 // loop_exit
      _
    %370 = vsyncpa [#allocation3], 1
    %s371 = scalar_lea.sflag [#allocation3], 1
    %372 = vsyncpa %s371, 1
    %373 = vsyncpa [#allocation6], 1
    %s374 = scalar_lea.sflag [#allocation6], 1
    %375 = vsyncpa %s374, 1
    %376 = vsyncpa [#allocation4], 1
    %s377 = scalar_lea.sflag [#allocation4], 1
    %378 = vsyncpa %s377, 1

</llo_original>
